<compile_context>
chip_gen: v7x
topology: tpu7x:2x2x1
jax: 0.10.0
libtpu: 0.0.40
codegen_flags: <defaults>
</compile_context>

<pallas_src>
import functools

import jax
import jax.numpy as jnp
from jax.experimental import pallas as pl
from jax.experimental.pallas import tpu as pltpu

EPS = 1e-5
L_TILE_ELEMWISE = 8192          # lane tile for the elementwise BN+ReLU pass (mult. of 128)


@functools.lru_cache(maxsize=None)
def _vmem_limit_bytes():
    """Generation-aware VMEM limit: ~85% of physical (54 MiB v7x, ~108 MiB v5e/v6e)."""
    cap = 0
    try:
        cap = int(pltpu.get_tpu_info().vmem_capacity_bytes)
    except Exception:
        cap = 0
    if cap <= 0:
        cap = 64 * 1024 * 1024
    return min(int(cap * 0.85), 110 * 1024 * 1024)


def _conv_stats_kernel(*refs, k_taps, pad, apply_in_bn_relu):
    """One batch row: [fused BN+ReLU on input ->] 'same' Conv1d -> partial BN stats.

    Block shapes (grid step i over N):
      x_ref : (1, C_in, L)        input row (channels on sublanes, L lane-dense)
      w_ref : (K, C_out, C_in)    per-tap conv weight (resident across the grid)
      b_ref : (C_out, 1)          conv bias
      s_ref, t_ref: (C_in, 1)     fused input-BN scale/shift (pass 2 only)
      h_ref : (1, C_out, L)       pre-BN conv output (stored bf16)
      st_ref: (1, C_out, 2)       per-row partial [sum, sum_sq] over L (f32)
    """
    if apply_in_bn_relu:
        x_ref, w_ref, b_ref, s_ref, t_ref, h_ref, st_ref = refs
    else:
        x_ref, w_ref, b_ref, h_ref, st_ref = refs

    x = x_ref[0].astype(jnp.float32)                           # (C_in, L), f32 everywhere
    if apply_in_bn_relu:
        # Fused BatchNorm (per-channel scale/shift) + ReLU of the previous stage, applied
        # before this conv's zero padding (matches conv2(relu(bn1(conv1(x))))).
        x = jnp.maximum(x * s_ref[...] + t_ref[...], 0.0)

    c_in, l = x.shape
    c_out = h_ref.shape[1]
    col = jax.lax.broadcasted_iota(jnp.int32, (1, l), 1)       # lane index, for edge masks

    # 'same' conv as K accumulated matmuls over roll-shifted inputs (no concatenates).
    #   h[:, j] = b + sum_k W_k @ x[:, j + k - pad]   (zero outside [0, L))
    h = jnp.zeros((c_out, l), jnp.float32)
    for k in range(k_taps):
        d = k - pad                                            # column offset of this tap
        if d == 0:
            shifted = x
        else:
            shifted = pltpu.roll(x, (-d) % l, 1)               # shifted[:, j] = x[:, (j+d)%L]
            if d > 0:
                mask = col < (l - d)                           # zero last d (wrapped) cols
            else:
                mask = col >= (-d)                             # zero first |d| (wrapped) cols
            shifted = jnp.where(mask, shifted, 0.0)
        h = h + jnp.dot(w_ref[k].astype(jnp.bfloat16),
                        shifted.astype(jnp.bfloat16),
                        preferred_element_type=jnp.float32)
    h = h + b_ref[...]                                         # (C_out, L), f32 accumulator

    h_ref[0] = h.astype(h_ref.dtype)                           # bf16 store (HBM traffic /2)

    # Single-pass BN statistics from the f32 accumulator (unaffected by the bf16 store).
    ssum = jnp.sum(h, axis=1, keepdims=True)                   # (C_out, 1)
    ssq = jnp.sum(h * h, axis=1, keepdims=True)                # (C_out, 1)
    st_ref[0] = jnp.concatenate([ssum, ssq], axis=1)           # (C_out, 2)


def _bn_relu_kernel(h_ref, s_ref, t_ref, o_ref):
    # y = max(h * s + t, 0) with per-row s, t (fused BatchNorm + ReLU), f32 math.
    h = h_ref[...].astype(jnp.float32)
    o_ref[...] = jnp.maximum(h * s_ref[...] + t_ref[...], 0.0).astype(o_ref.dtype)


def _conv_pass(x, wt, b, s=None, t=None, *, k_taps, pad, out_dtype=jnp.bfloat16):
    """Tiled 'same' Conv1d (optionally preceded by fused BN+ReLU) + partial BN stats.

    Grid over the batch dimension N, marked "parallel" (software-pipelined DMA/compute,
    megacore-shardable).  Each block is one full (C, L) row: lane-dense in L, so the
    'same'-padding halo never crosses a block boundary.
    """
    n, c_in, l = x.shape
    c_out = wt.shape[1]
    apply_in = s is not None

    args = [x, wt, b] + ([s, t] if apply_in else [])
    in_specs = [
        pl.BlockSpec((1, c_in, l), lambda i: (i, 0, 0)),
        pl.BlockSpec((k_taps, c_out, c_in), lambda i: (0, 0, 0)),
        pl.BlockSpec((c_out, 1), lambda i: (0, 0)),
    ]
    if apply_in:
        in_specs += [pl.BlockSpec((c_in, 1), lambda i: (0, 0)),
                     pl.BlockSpec((c_in, 1), lambda i: (0, 0))]

    kernel = functools.partial(_conv_stats_kernel, k_taps=k_taps, pad=pad,
                               apply_in_bn_relu=apply_in)

    flops = 2 * n * l * k_taps * c_in * c_out + 8 * n * l * c_out
    bytes_accessed = (x.dtype.itemsize * x.size
                      + jnp.dtype(out_dtype).itemsize * n * c_out * l
                      + 4 * n * c_out * 2
                      + 4 * (k_taps * c_out * c_in + c_out + (2 * c_in if apply_in else 0)))

    h, st = pl.pallas_call(
        kernel,
        grid=(n,),
        in_specs=in_specs,
        out_specs=[pl.BlockSpec((1, c_out, l), lambda i: (i, 0, 0)),
                   pl.BlockSpec((1, c_out, 2), lambda i: (i, 0, 0))],
        out_shape=[jax.ShapeDtypeStruct((n, c_out, l), out_dtype),
                   jax.ShapeDtypeStruct((n, c_out, 2), jnp.float32)],
        compiler_params=pltpu.CompilerParams(
            dimension_semantics=("parallel",),
            vmem_limit_bytes=_vmem_limit_bytes()),
        cost_estimate=pl.CostEstimate(flops=flops, transcendentals=0,
                                      bytes_accessed=bytes_accessed),
    )(*args)
    return h, st


def _bn_relu_pass(h, s, t):
    """Elementwise fused BN+ReLU: flatten (N,C,L)->(N*C,L), big lane-dense blocks."""
    n, c, l = h.shape
    rows = n * c
    h2d = h.reshape(rows, l)                     # contiguous reshape (no HBM copy)
    s_rows = jnp.tile(s, (n, 1))                 # (rows, 1) per-row scale
    t_rows = jnp.tile(t, (n, 1))                 # (rows, 1) per-row shift
    lt = l if l <= L_TILE_ELEMWISE else L_TILE_ELEMWISE
    grid = (pl.cdiv(l, lt),)

    out = pl.pallas_call(
        _bn_relu_kernel,
        grid=grid,
        in_specs=[pl.BlockSpec((rows, lt), lambda j: (0, j)),
                  pl.BlockSpec((rows, 1), lambda j: (0, 0)),
                  pl.BlockSpec((rows, 1), lambda j: (0, 0))],
        out_specs=pl.BlockSpec((rows, lt), lambda j: (0, j)),
        out_shape=jax.ShapeDtypeStruct((rows, l), jnp.float32),
        compiler_params=pltpu.CompilerParams(
            dimension_semantics=("parallel",),
            vmem_limit_bytes=_vmem_limit_bytes()),
    )(h2d, s_rows, t_rows)
    return out.reshape(n, c, l)


def _bn_affine(partial_stats, gamma, beta, count):
    """Reduce per-row partial sums -> fused training-mode BN scale/shift (tiny vectors)."""
    tot = jnp.sum(partial_stats, axis=0)                      # (C, 2)
    mean = tot[:, 0] / count
    # Biased variance (training-mode BN normalization), f32; clamp guards cancellation.
    var = jnp.maximum(tot[:, 1] / count - mean * mean, 0.0)
    s = gamma * jax.lax.rsqrt(var + EPS)
    t = beta - mean * s
    return s.reshape(-1, 1), t.reshape(-1, 1)


def double_conv1d_bn(x_ncl, params, kernel_size=3, padding=1):
    """Forward pass of double_conv1d_bn in PyTorch NCL layout.

    x_ncl: (N, C_in, L) float32.  Returns (N, C_out, L) float32.
    Training-mode BatchNorm1d semantics: batch statistics over (N, L), biased variance,
    eps=1e-5 (a freshly constructed nn.Module is in training mode).
    """
    w1, b1, g1, be1, w2, b2, g2, be2 = params
    n, c_in, l = x_ncl.shape
    c_out = w1.shape[0]
    k = kernel_size
    assert 2 * padding == k - 1, "only stride-1 'same' convolutions (odd K) are supported"

    # Per-tap weight layout (K, C_out, C_in) so the kernel indexes w_ref[k].
    w1t = jnp.transpose(w1, (2, 0, 1))
    w2t = jnp.transpose(w2, (2, 0, 1))

    # Pass 1: conv1 (+ per-channel partial stats of its f32 output); h1 stored bf16.
    h1, st1 = _conv_pass(x_ncl, w1t, b1.reshape(c_out, 1), k_taps=k, pad=padding)
    s1, t1 = _bn_affine(st1, g1, be1, n * l)

    # Pass 2: bn1 + relu fused into conv2's input, conv2 (+ partial stats); h2 stored bf16.
    h2, st2 = _conv_pass(h1, w2t, b2.reshape(c_out, 1), s1, t1, k_taps=k, pad=padding)
    s2, t2 = _bn_affine(st2, g2, be2, n * l)

    # Pass 3: bn2 + relu, flattened (N*C, L) with big lane-dense blocks; f32 output.
    return _bn_relu_pass(h2, s2, t2)


def init_params(key, in_channels, out_channels, kernel_size=3):
    """Deterministic synthetic init matching nn.Conv1d / nn.BatchNorm1d shapes."""
    k1, k2, k3, k4 = jax.random.split(key, 4)
    w1 = 0.1 * jax.random.normal(k1, (out_channels, in_channels, kernel_size), jnp.float32)
    b1 = 0.1 * jax.random.normal(k2, (out_channels,), jnp.float32)
    w2 = 0.1 * jax.random.normal(k3, (out_channels, out_channels, kernel_size), jnp.float32)
    b2 = 0.1 * jax.random.normal(k4, (out_channels,), jnp.float32)
    gamma1 = jnp.ones((out_channels,), jnp.float32)
    beta1 = jnp.zeros((out_channels,), jnp.float32)
    gamma2 = jnp.ones((out_channels,), jnp.float32)
    beta2 = jnp.zeros((out_channels,), jnp.float32)
    return (w1, b1, gamma1, beta1, w2, b2, gamma2, beta2)


if __name__ == "__main__":
    N, CIN, COUT, L = 2, 4, 8, 128     # small, lane-aligned 1D signal

    key = jax.random.PRNGKey(0)
    kx, kp = jax.random.split(key)
    x = jax.random.normal(kx, (N, CIN, L), jnp.float32)   # PyTorch NCL input
    params = init_params(kp, CIN, COUT, kernel_size=3)

    out = double_conv1d_bn(x, params)
    out = jax.block_until_ready(out)
    assert out.shape == (N, COUT, L)
    print("KERNEL_OK")
</pallas_src>

<mosaic_0001>
module attributes {stable_mosaic.version = 11 : i64} {
  func.func @_conv_stats_kernel(%arg0: i32, %arg1: memref<1x4x128xf32, #tpu.memory_space<vmem>>, %arg2: memref<3x8x4xf32, #tpu.memory_space<vmem>>, %arg3: memref<8x1xf32, #tpu.memory_space<vmem>>, %arg4: memref<1x8x128xbf16, #tpu.memory_space<vmem>>, %arg5: memref<1x8x2xf32, #tpu.memory_space<vmem>>) attributes {dimension_semantics = [#tpu.dimension_semantics<parallel>], iteration_bounds = array<i64: 2>, scalar_prefetch = 0 : i64, scratch_operands = 0 : i64, tpu.core_type = #tpu.core_type<tc>, window_params = [{transform_indices = @transform_0, window_bounds = array<i64: 1, 4, 128>}, {pipeline_mode = #tpu.pipeline_mode<synchronous>, transform_indices = @transform_1, window_bounds = array<i64: 3, 8, 4>}, {pipeline_mode = #tpu.pipeline_mode<synchronous>, transform_indices = @transform_2, window_bounds = array<i64: 8, 1>}, {transform_indices = @transform_3, window_bounds = array<i64: 1, 8, 128>}, {transform_indices = @transform_4, window_bounds = array<i64: 1, 8, 2>}]} {
    %c0 = arith.constant 0 : index
    %c0_0 = arith.constant 0 : index
    %c0_1 = arith.constant 0 : index
    %0 = vector.load %arg1[%c0, %c0_0, %c0_1] : memref<1x4x128xf32, #tpu.memory_space<vmem>>, vector<1x4x128xf32>
    %1 = vector.shape_cast %0 : vector<1x4x128xf32> to vector<4x128xf32>
    %2 = tpu.iota {dimensions = array<i32: 1>} : vector<1x128xi32>
    %cst = arith.constant 0.000000e+00 : f32
    %3 = vector.broadcast %cst : f32 to vector<8x128xf32>
    %c1_i32 = arith.constant 1 : i32
    %4 = tpu.dynamic_rotate %1 by %c1_i32 dim 1 : vector<4x128xf32>, i32 -> vector<4x128xf32>
    %c1_i32_2 = arith.constant 1 : i32
    %5 = vector.broadcast %c1_i32_2 : i32 to vector<1x128xi32>
    %6 = arith.cmpi sge, %2, %5 : vector<1x128xi32>
    %cst_3 = arith.constant 0.000000e+00 : f32
    %7 = vector.shape_cast %6 : vector<1x128xi1> to vector<1x128xi1>
    %8 = vector.broadcast %7 : vector<1x128xi1> to vector<4x128xi1>
    %9 = vector.broadcast %cst_3 : f32 to vector<4x128xf32>
    %10 = arith.select %8, %4, %9 : vector<4x128xi1>, vector<4x128xf32>
    %c0_4 = arith.constant 0 : index
    %c0_5 = arith.constant 0 : index
    %c0_6 = arith.constant 0 : index
    %11 = vector.load %arg2[%c0_4, %c0_5, %c0_6] : memref<3x8x4xf32, #tpu.memory_space<vmem>>, vector<1x8x4xf32>
    %12 = vector.shape_cast %11 : vector<1x8x4xf32> to vector<8x4xf32>
    %13 = arith.truncf %12 : vector<8x4xf32> to vector<8x4xbf16>
    %14 = arith.truncf %10 : vector<4x128xf32> to vector<4x128xbf16>
    %cst_7 = arith.constant dense<0.000000e+00> : vector<8x128xf32>
    %15 = tpu.matmul %13, %14, %cst_7 {dimension_numbers = #tpu.dot_dimension_numbers<[1], [0], [0], [1], [0, 0, 1, 1], [], []>} : vector<8x4xbf16>, vector<4x128xbf16>, vector<8x128xf32> -> vector<8x128xf32>
    %16 = arith.addf %3, %15 : vector<8x128xf32>
    %c1 = arith.constant 1 : index
    %c0_8 = arith.constant 0 : index
    %c0_9 = arith.constant 0 : index
    %17 = vector.load %arg2[%c1, %c0_8, %c0_9] : memref<3x8x4xf32, #tpu.memory_space<vmem>>, vector<1x8x4xf32>
    %18 = vector.shape_cast %17 : vector<1x8x4xf32> to vector<8x4xf32>
    %19 = arith.truncf %18 : vector<8x4xf32> to vector<8x4xbf16>
    %20 = arith.truncf %1 : vector<4x128xf32> to vector<4x128xbf16>
    %cst_10 = arith.constant dense<0.000000e+00> : vector<8x128xf32>
    %21 = tpu.matmul %19, %20, %cst_10 {dimension_numbers = #tpu.dot_dimension_numbers<[1], [0], [0], [1], [0, 0, 1, 1], [], []>} : vector<8x4xbf16>, vector<4x128xbf16>, vector<8x128xf32> -> vector<8x128xf32>
    %22 = arith.addf %16, %21 : vector<8x128xf32>
    %c127_i32 = arith.constant 127 : i32
    %23 = tpu.dynamic_rotate %1 by %c127_i32 dim 1 : vector<4x128xf32>, i32 -> vector<4x128xf32>
    %c127_i32_11 = arith.constant 127 : i32
    %24 = vector.broadcast %c127_i32_11 : i32 to vector<1x128xi32>
    %25 = arith.cmpi slt, %2, %24 : vector<1x128xi32>
    %cst_12 = arith.constant 0.000000e+00 : f32
    %26 = vector.shape_cast %25 : vector<1x128xi1> to vector<1x128xi1>
    %27 = vector.broadcast %26 : vector<1x128xi1> to vector<4x128xi1>
    %28 = vector.broadcast %cst_12 : f32 to vector<4x128xf32>
    %29 = arith.select %27, %23, %28 : vector<4x128xi1>, vector<4x128xf32>
    %c2 = arith.constant 2 : index
    %c0_13 = arith.constant 0 : index
    %c0_14 = arith.constant 0 : index
    %30 = vector.load %arg2[%c2, %c0_13, %c0_14] : memref<3x8x4xf32, #tpu.memory_space<vmem>>, vector<1x8x4xf32>
    %31 = vector.shape_cast %30 : vector<1x8x4xf32> to vector<8x4xf32>
    %32 = arith.truncf %31 : vector<8x4xf32> to vector<8x4xbf16>
    %33 = arith.truncf %29 : vector<4x128xf32> to vector<4x128xbf16>
    %cst_15 = arith.constant dense<0.000000e+00> : vector<8x128xf32>
    %34 = tpu.matmul %32, %33, %cst_15 {dimension_numbers = #tpu.dot_dimension_numbers<[1], [0], [0], [1], [0, 0, 1, 1], [], []>} : vector<8x4xbf16>, vector<4x128xbf16>, vector<8x128xf32> -> vector<8x128xf32>
    %35 = arith.addf %22, %34 : vector<8x128xf32>
    %c0_16 = arith.constant 0 : index
    %c0_17 = arith.constant 0 : index
    %36 = vector.load %arg3[%c0_16, %c0_17] : memref<8x1xf32, #tpu.memory_space<vmem>>, vector<8x1xf32>
    %37 = vector.broadcast %36 : vector<8x1xf32> to vector<8x128xf32>
    %38 = arith.addf %35, %37 : vector<8x128xf32>
    %39 = arith.truncf %38 : vector<8x128xf32> to vector<8x128xbf16>
    %c0_18 = arith.constant 0 : index
    %c0_19 = arith.constant 0 : index
    %c0_20 = arith.constant 0 : index
    %40 = vector.load %arg4[%c0_18, %c0_19, %c0_20] : memref<1x8x128xbf16, #tpu.memory_space<vmem>>, vector<1x8x128xbf16>
    %41 = vector.shape_cast %40 : vector<1x8x128xbf16> to vector<8x128xbf16>
    %42 = vector.shape_cast %39 : vector<8x128xbf16> to vector<1x8x128xbf16>
    tpu.vector_store %arg4[%c0_18, %c0_19, %c0_20], %42 {strides = array<i32>} : memref<1x8x128xbf16, #tpu.memory_space<vmem>>, vector<1x8x128xbf16>,
    %cst_21 = arith.constant dense<0.000000e+00> : vector<8xf32>
    %43 = vector.multi_reduction <add>, %38, %cst_21 [1] : vector<8x128xf32> to vector<8xf32>
    %44 = vector.shape_cast %43 : vector<8xf32> to vector<8x1xf32>
    %45 = arith.mulf %38, %38 : vector<8x128xf32>
    %cst_22 = arith.constant dense<0.000000e+00> : vector<8xf32>
    %46 = vector.multi_reduction <add>, %45, %cst_22 [1] : vector<8x128xf32> to vector<8xf32>
    %47 = vector.shape_cast %46 : vector<8xf32> to vector<8x1xf32>
    %48 = tpu.concatenate %44, %47 in 1 : vector<8x1xf32>, vector<8x1xf32> -> vector<8x2xf32>
    %c0_23 = arith.constant 0 : index
    %c0_24 = arith.constant 0 : index
    %c0_25 = arith.constant 0 : index
    %49 = vector.load %arg5[%c0_23, %c0_24, %c0_25] : memref<1x8x2xf32, #tpu.memory_space<vmem>>, vector<1x8x2xf32>
    %50 = vector.shape_cast %49 : vector<1x8x2xf32> to vector<8x2xf32>
    %51 = vector.shape_cast %48 : vector<8x2xf32> to vector<1x8x2xf32>
    tpu.vector_store %arg5[%c0_23, %c0_24, %c0_25], %51 {strides = array<i32>} : memref<1x8x2xf32, #tpu.memory_space<vmem>>, vector<1x8x2xf32>,
    return
  }
  func.func @transform_0(%arg0: i32) -> (i32, i32, i32) {
    %c0_i32 = arith.constant 0 : i32
    %c0_i32_0 = arith.constant 0 : i32
    %c0_i32_1 = arith.constant 0 : i32
    return %arg0, %c0_i32, %c0_i32_0 : i32, i32, i32
  }
  func.func @transform_1(%arg0: i32) -> (i32, i32, i32) {
    %c0_i32 = arith.constant 0 : i32
    %c0_i32_0 = arith.constant 0 : i32
    %c0_i32_1 = arith.constant 0 : i32
    %c0_i32_2 = arith.constant 0 : i32
    return %c0_i32, %c0_i32_0, %c0_i32_1 : i32, i32, i32
  }
  func.func @transform_2(%arg0: i32) -> (i32, i32) {
    %c0_i32 = arith.constant 0 : i32
    %c0_i32_0 = arith.constant 0 : i32
    %c0_i32_1 = arith.constant 0 : i32
    return %c0_i32, %c0_i32_0 : i32, i32
  }
  func.func @transform_3(%arg0: i32) -> (i32, i32, i32) {
    %c0_i32 = arith.constant 0 : i32
    %c0_i32_0 = arith.constant 0 : i32
    %c0_i32_1 = arith.constant 0 : i32
    return %arg0, %c0_i32, %c0_i32_0 : i32, i32, i32
  }
  func.func @transform_4(%arg0: i32) -> (i32, i32, i32) {
    %c0_i32 = arith.constant 0 : i32
    %c0_i32_0 = arith.constant 0 : i32
    %c0_i32_1 = arith.constant 0 : i32
    return %arg0, %c0_i32, %c0_i32_0 : i32, i32, i32
  }
}

</mosaic_0001>

<llo_original>
// kernel: tpu_custom_call.1
$region0: #{tpu_custom_call.1}
  #allocation0 [shape = 'u32[]', space=smem, size = 0x4, offset = 0x4, fixed_abs, tag = 'smem constant byte address 0x4 - core index']
  #allocation1 [shape = 'u32[144,128]{1,0:T(1,128)}', space=vmem, size = 0x12000, scoped, tag = 'internal scratch']
  %s0 = inlined_call_operand.vmem [shape: f32[2,4,128], index: 0, kind: input, shape index: {}]
  %s1 = inlined_call_operand.vmem [shape: f32[3,8,4], index: 1, kind: input, shape index: {}]
  %s2 = inlined_call_operand.vmem [shape: f32[8,1], index: 2, kind: input, shape index: {}]
  %s3 = inlined_call_operand.hbm [shape: bf16[2,8,128], index: 3, kind: output, shape index: {0}]
  %s4 = inlined_call_operand.vmem [shape: f32[2,8,2], index: 4, kind: output, shape index: {1}]
  %5 = xla_tuple %s3, %s4
  %s6 = sld [smem:[#allocation0]]
  $region53: #{tpu_custom_call.1} parent=0
    _
  %s8 = ssub.s32 1, %s6
  %s9 = scalar_select 0, %s8, %s6
  $region1: #{tpu_custom_call.1} parent=0
    #allocation2 [shape = 'u8[4096]{0}', space=vmem, size = 0x1000, scoped, tag = 'output window, operand 0']
    #allocation3 [shape = 's32[2]{0}', space=sflag, size = 0x8, scoped, tag = 'scoped memory for tpu_custom_call.1']
    %10 = vsyncpa [#allocation3], 0
    %s11 = scalar_lea.sflag [#allocation3], 1
    %12 = vsyncpa %s11, 0
    loop: start=0, step=1, limit=4
    $region2: #{tpu_custom_call.1} parent=1 // loop_pre_header
      _
    $region3: #{tpu_custom_call.1} parent=1 // loop_header
      %s14 = sphi 0, %s18
      %p15 = scmp.ge.s32.totalorder %s14, 4
      %s24 = sphi 0, %s26
      %s27 = sphi 0, %s24
      %s28 = sphi 0, %s27
      %s44 = sphi 0, %s28
      %s48 = sphi 0, %s48
      %s50 = sphi 0, %s48
      %s51 = sphi 0, %s50
      %s65 = sphi 0, %s51
      %s69 = sphi 0, %s69
      %s71 = sphi 0, %s69
      %s72 = sphi 0, %s71
      %s86 = sphi 0, %s72
      %s92 = sphi 0, %s94
      %s95 = sphi 0, %s92
      %s96 = sphi 0, %s95
      %s112 = sphi 0, %s96
      %s118 = sphi 0, %s120
      %s121 = sphi 0, %s118
      %s122 = sphi 0, %s121
      %s138 = sphi 0, %s122
    $region4: #{tpu_custom_call.1} parent=1 // loop_header_branch
      %17 = sbr.rel (%p15) target = $region8
    $region5: #{tpu_custom_call.1} parent=1 // loop_body
      %s19 = ssub.s32 %s14, 1
      %s20 = ssub.s32 %s14, 2
      %s21 = sadd.s32 %s14, 1
      %s22 = ssub.s32 %s14, %s21
      %p23 = scmp.eq.s32.totalorder %s22, 0
      %s25 = sadd.s32 %s24, 1
      %s26 = scalar_select %p23, %s24, %s25
      %p29 = pneg %p23
      %p30 = scmp.eq.s32.totalorder %s14, 1
      %p31 = por %p29, %p30
      %p32 = scmp.ne.s32.totalorder %s24, %s27
      %p33 = scmp.eq.s32.totalorder %s14, 0
      %p34 = por %p32, %p33
      %p35 = scmp.ne.s32.totalorder %s24, %s27
      %p36 = scmp.eq.s32.totalorder %s19, 1
      %p37 = por %p35, %p36
      %p38 = scmp.ne.s32.totalorder %s27, %s28
      %p39 = scmp.eq.s32.totalorder %s19, 0
      %p40 = por %p38, %p39
      %p41 = scmp.ne.s32.totalorder %s27, %s28
      %p42 = scmp.eq.s32.totalorder %s20, 1
      %p43 = por %p41, %p42
      %p45 = scmp.ne.s32.totalorder %s28, %s44
      %p46 = scmp.eq.s32.totalorder %s20, 0
      %p47 = por %p45, %p46
      %s49 = sadd.s32 %s48, 1
      %p52 = scmp.eq.s32.totalorder %s14, 1
      %p53 = scmp.ne.s32.totalorder %s48, %s50
      %p54 = scmp.eq.s32.totalorder %s14, 0
      %p55 = por %p53, %p54
      %p56 = scmp.ne.s32.totalorder %s48, %s50
      %p57 = scmp.eq.s32.totalorder %s19, 1
      %p58 = por %p56, %p57
      %p59 = scmp.ne.s32.totalorder %s50, %s51
      %p60 = scmp.eq.s32.totalorder %s19, 0
      %p61 = por %p59, %p60
      %p62 = scmp.ne.s32.totalorder %s50, %s51
      %p63 = scmp.eq.s32.totalorder %s20, 1
      %p64 = por %p62, %p63
      %p66 = scmp.ne.s32.totalorder %s51, %s65
      %p67 = scmp.eq.s32.totalorder %s20, 0
      %p68 = por %p66, %p67
      %s70 = sadd.s32 %s69, 1
      %p73 = scmp.eq.s32.totalorder %s14, 1
      %p74 = scmp.ne.s32.totalorder %s69, %s71
      %p75 = scmp.eq.s32.totalorder %s14, 0
      %p76 = por %p74, %p75
      %p77 = scmp.ne.s32.totalorder %s69, %s71
      %p78 = scmp.eq.s32.totalorder %s19, 1
      %p79 = por %p77, %p78
      %p80 = scmp.ne.s32.totalorder %s71, %s72
      %p81 = scmp.eq.s32.totalorder %s19, 0
      %p82 = por %p80, %p81
      %p83 = scmp.ne.s32.totalorder %s71, %s72
      %p84 = scmp.eq.s32.totalorder %s20, 1
      %p85 = por %p83, %p84
      %p87 = scmp.ne.s32.totalorder %s72, %s86
      %p88 = scmp.eq.s32.totalorder %s20, 0
      %p89 = por %p87, %p88
      %s90 = ssub.s32 %s14, %s21
      %p91 = scmp.eq.s32.totalorder %s90, 0
      %s93 = sadd.s32 %s92, 1
      %s94 = scalar_select %p91, %s92, %s93
      %p97 = pneg %p91
      %p98 = scmp.eq.s32.totalorder %s14, 1
      %p99 = por %p97, %p98
      %p100 = scmp.ne.s32.totalorder %s92, %s95
      %p101 = scmp.eq.s32.totalorder %s14, 0
      %p102 = por %p100, %p101
      %p103 = scmp.ne.s32.totalorder %s92, %s95
      %p104 = scmp.eq.s32.totalorder %s19, 1
      %p105 = por %p103, %p104
      %p106 = scmp.ne.s32.totalorder %s95, %s96
      %p107 = scmp.eq.s32.totalorder %s19, 0
      %p108 = por %p106, %p107
      %p109 = scmp.ne.s32.totalorder %s95, %s96
      %p110 = scmp.eq.s32.totalorder %s20, 1
      %p111 = por %p109, %p110
      %p113 = scmp.ne.s32.totalorder %s96, %s112
      %p114 = scmp.eq.s32.totalorder %s20, 0
      %p115 = por %p113, %p114
      %s116 = ssub.s32 %s14, %s21
      %p117 = scmp.eq.s32.totalorder %s116, 0
      %s119 = sadd.s32 %s118, 1
      %s120 = scalar_select %p117, %s118, %s119
      %p123 = pneg %p117
      %p124 = scmp.eq.s32.totalorder %s14, 1
      %p125 = por %p123, %p124
      %p126 = scmp.ne.s32.totalorder %s118, %s121
      %p127 = scmp.eq.s32.totalorder %s14, 0
      %p128 = por %p126, %p127
      %p129 = scmp.ne.s32.totalorder %s118, %s121
      %p130 = scmp.eq.s32.totalorder %s19, 1
      %p131 = por %p129, %p130
      %p132 = scmp.ne.s32.totalorder %s121, %s122
      %p133 = scmp.eq.s32.totalorder %s19, 0
      %p134 = por %p132, %p133
      %p135 = scmp.ne.s32.totalorder %s121, %s122
      %p136 = scmp.eq.s32.totalorder %s20, 1
      %p137 = por %p135, %p136
      %p139 = scmp.ne.s32.totalorder %s122, %s138
      %p140 = scmp.eq.s32.totalorder %s20, 0
      %p141 = por %p139, %p140
      %p142 = scmp.le.s32.totalorder 1, %s14
      %p143 = scmp.lt.s32.totalorder %s14, 3
      %p144 = pnand %p142, %p143
      %p145 = pneg %p144
      // Predicated region
      $region9: #{tpu_custom_call.1} parent=5 // pred_check
        _
      $region10: #{tpu_custom_call.1} parent=5 // pred_check_branch
        %147 = sbr.rel (%p144) target = $region12
      $region11: #{tpu_custom_call.1} parent=5 // pred_region
        %s148 = ssub.s32 %s14, 1
        // Predicated region
        $region13: #{tpu_custom_call.1} parent=11 // pred_check
          %p149 = pneg %p61
        $region14: #{tpu_custom_call.1} parent=11 // pred_check_branch
          %151 = sbr.rel (%p149) target = $region16
        $region15: #{tpu_custom_call.1} parent=11 // pred_region
          _
        $region16: #{tpu_custom_call.1} parent=11 // pred_fallthru
          _
        // Predicated region
        $region17: #{tpu_custom_call.1} parent=11 // pred_check
          %p152 = pneg %p82
        $region18: #{tpu_custom_call.1} parent=11 // pred_check_branch
          %154 = sbr.rel (%p152) target = $region20
        $region19: #{tpu_custom_call.1} parent=11 // pred_region
          _
        $region20: #{tpu_custom_call.1} parent=11 // pred_fallthru
          _
      $region12: #{tpu_custom_call.1} parent=5 // pred_fallthru
        _
      %p155 = scmp.lt.s32.totalorder %s14, 2
      // Predicated region
      $region21: #{tpu_custom_call.1} parent=5 // pred_check
        %p156 = pneg %p155
      $region22: #{tpu_custom_call.1} parent=5 // pred_check_branch
        %158 = sbr.rel (%p156) target = $region24
      $region23: #{tpu_custom_call.1} parent=5 // pred_region
        // Predicated region
        $region25: #{tpu_custom_call.1} parent=23 // pred_check
          %p159 = pneg %p34
        $region26: #{tpu_custom_call.1} parent=23 // pred_check_branch
          %161 = sbr.rel (%p159) target = $region28
        $region27: #{tpu_custom_call.1} parent=23 // pred_region
          %p162 = scmp.lt.s32.totalorder %s14, 1
          %s163 = scalar_select %p162, %s14, 1
          %s164 = smul.addr %s163, 4
          %s165 = scalar_lea.vmem %s0, %s164
        $region28: #{tpu_custom_call.1} parent=23 // pred_fallthru
          _
      $region24: #{tpu_custom_call.1} parent=5 // pred_fallthru
        _
      %p166 = scmp.le.s32.totalorder 1, %s14
      %p167 = scmp.lt.s32.totalorder %s14, 3
      %p168 = pnand %p166, %p167
      %p169 = pneg %p168
      // Predicated region
      $region29: #{tpu_custom_call.1} parent=5 // pred_check
        _
      $region30: #{tpu_custom_call.1} parent=5 // pred_check_branch
        %171 = sbr.rel (%p168) target = $region32
      $region31: #{tpu_custom_call.1} parent=5 // pred_region
        %s172 = ssub.s32 %s14, 1
        %p173 = scmp.lt.s32.totalorder %s19, 1
        %s174 = scalar_select %p173, %s19, 1
        %s175 = smul.addr %s174, 4
        %s176 = scalar_lea.vmem %s0, %s175
        %p177 = pneg %p40
        %p178 = pneg %p37
        %p179 = pneg %p61
        %p180 = pneg %p58
        %p181 = pneg %p82
        %p182 = pneg %p79
        %p183 = pneg %p108
        %p184 = pneg %p105
        %s185 = sand.u32 %s95, 1
        %s186 = scalar_lea.sflag [#allocation3], %s185
        %s187 = sand.u32 %s95, 1
        %s188 = smul.addr %s187, 4
        %s189 = scalar_lea.vmem [#allocation2], %s188
        %p190 = pneg %p134
        %p191 = pneg %p131
        %p192 = scmp.lt.s32.totalorder %s19, 1
        %s193 = scalar_select %p192, %s19, 1
        %s194 = smul.addr %s193, 8
        %s195 = scalar_lea.vmem %s4, %s194
        %p196 = scmp.lt.s32.totalorder %s19, 1
        %s197 = scalar_select %p196, %s19, 1
        %s198 = smul.addr %s197, 4
        %s199 = scalar_lea.vmem %s0, %s198
        %p200 = scmp.lt.s32.totalorder %s19, 1
        %s201 = scalar_select %p200, %s19, 1
        %s202 = smul.addr %s201, 8
        %s203 = scalar_lea.vmem %s4, %s202
        %v205 = vld [vmem:[%s199] sm:$0xf]
        %v206 = vlaneseq
        %v207 = vand.u32 %v206, 127
        %208 = vrot.lane.b32.xlu0 %v205, 1
        %v209 = vpop.permute.xlu0 %208
        %vm210 = vcmp.ge.s32.totalorder %v207, 1
        %v211 = vsel %vm210, 1, 0
        %vm212 = vcmp.eq.s32.totalorder %v211, 1
        %v213 = vsel %vm212, %v209, 0.0
        %v214 = vld [vmem:[%s1] sm:$0xff]
        %v215 = vpack.c.bf16 %v214, %v214
        %v216 = vpack.c.bf16 %v213, %v213
        %s217 = scalar_lea.vmem %s1, 8
        %v218 = vld [vmem:[%s217] sm:$0xff]
        %v219 = vpack.c.bf16 %v218, %v218
        %v220 = vpack.c.bf16 %v205, %v205
        %vm221 = vcmask 31744
        %v223 = vsel %vm221, %v219, 0
        %vm225 = vcmask 1041408
        %v227 = vsel %vm225, %v220, 0
        %229 = vmatprep.subr.bf16.mxu0 0
        %230 = vmatpush1.bf16.msra.mxu0 %v227
        %231 = vmatprep.subr.bf16.mxu0 0
        %232 = vmatpush1.bf16.msra.mxu0 0
        %233 = vmatprep.subr.bf16.mxu0 0
        %234 = vmatpush1.bf16.msra.mxu0 0
        %235 = vmatprep.subr.bf16.mxu0 0
        %236 = vmatpush1.bf16.msra.mxu0 0
        %237 = vmatprep.subr.bf16.mxu0 0
        %238 = vmatpush1.bf16.msra.mxu0 0
        %239 = vmatprep.subr.bf16.mxu0 0
        %240 = vmatpush1.bf16.msra.mxu0 0
        %241 = vmatprep.subr.bf16.mxu0 0
        %242 = vmatpush1.bf16.msra.mxu0 0
        %243 = vmatprep.subr.bf16.mxu0 0
        %244 = vmatpush1.bf16.msra.mxu0 0
        %245 = vmatprep.subr.bf16.mxu0 0
        %246 = vmatpush1.bf16.msra.mxu0 0
        %247 = vmatprep.subr.bf16.mxu0 0
        %248 = vmatpush1.bf16.msra.mxu0 0
        %249 = vmatprep.subr.bf16.mxu0 0
        %250 = vmatpush1.bf16.msra.mxu0 0
        %251 = vmatprep.subr.bf16.mxu0 0
        %252 = vmatpush1.bf16.msra.mxu0 0
        %253 = vmatprep.subr.bf16.mxu0 0
        %254 = vmatpush1.bf16.msra.mxu0 0
        %255 = vmatprep.subr.bf16.mxu0 0
        %256 = vmatpush1.bf16.msra.mxu0 0
        %257 = vmatprep.subr.bf16.mxu0 0
        %258 = vmatpush1.bf16.msra.mxu0 0
        %259 = vmatprep.subr.bf16.mxu0 0
        %260 = vmatpush1.bf16.msra.mxu0 0
        %261 = vmatprep.mubr.bf16.mxu0 0
        %262 = vmatmul.mubr.bf16.gmra.mrb[0].mxu0 %v223
        %v263 = vpop.f32.mrb[0].mxu0
        %v264 = vadd.f32 0.0, %v263
        %v265 = vpop.f32.mrb[0].mxu0
        %v266 = vpop.f32.mrb[0].mxu0
        %v267 = vpop.f32.mrb[0].mxu0
        %268 = vdwg.mxu0
        %v270 = vsel %vm221, %v215, 0
        %v273 = vsel %vm225, %v216, 0
        %275 = vmatprep.subr.bf16.mxu0 0
        %276 = vmatpush1.bf16.msra.mxu0 %v273
        %277 = vmatprep.subr.bf16.mxu0 0
        %278 = vmatpush1.bf16.msra.mxu0 0
        %279 = vmatprep.subr.bf16.mxu0 0
        %280 = vmatpush1.bf16.msra.mxu0 0
        %281 = vmatprep.subr.bf16.mxu0 0
        %282 = vmatpush1.bf16.msra.mxu0 0
        %283 = vmatprep.subr.bf16.mxu0 0
        %284 = vmatpush1.bf16.msra.mxu0 0
        %285 = vmatprep.subr.bf16.mxu0 0
        %286 = vmatpush1.bf16.msra.mxu0 0
        %287 = vmatprep.subr.bf16.mxu0 0
        %288 = vmatpush1.bf16.msra.mxu0 0
        %289 = vmatprep.subr.bf16.mxu0 0
        %290 = vmatpush1.bf16.msra.mxu0 0
        %291 = vmatprep.subr.bf16.mxu0 0
        %292 = vmatpush1.bf16.msra.mxu0 0
        %293 = vmatprep.subr.bf16.mxu0 0
        %294 = vmatpush1.bf16.msra.mxu0 0
        %295 = vmatprep.subr.bf16.mxu0 0
        %296 = vmatpush1.bf16.msra.mxu0 0
        %297 = vmatprep.subr.bf16.mxu0 0
        %298 = vmatpush1.bf16.msra.mxu0 0
        %299 = vmatprep.subr.bf16.mxu0 0
        %300 = vmatpush1.bf16.msra.mxu0 0
        %301 = vmatprep.subr.bf16.mxu0 0
        %302 = vmatpush1.bf16.msra.mxu0 0
        %303 = vmatprep.subr.bf16.mxu0 0
        %304 = vmatpush1.bf16.msra.mxu0 0
        %305 = vmatprep.subr.bf16.mxu0 0
        %306 = vmatpush1.bf16.msra.mxu0 0
        %307 = vmatprep.mubr.bf16.mxu0 0
        %308 = vmatmul.mubr.bf16.gmra.mrb[0].mxu0 %v270
        %v309 = vpop.f32.mrb[0].mxu0
        %v310 = vadd.f32 %v264, %v309
        %v311 = vpop.f32.mrb[0].mxu0
        %v312 = vpop.f32.mrb[0].mxu0
        %v313 = vpop.f32.mrb[0].mxu0
        %314 = vdwg.mxu0
        %315 = vrot.lane.b32.xlu0 %v205, 127
        %v316 = vpop.permute.xlu0 %315
        %vm317 = vcmp.lt.s32.totalorder %v207, 127
        %v318 = vsel %vm317, 1, 0
        %vm319 = vcmp.eq.s32.totalorder %v318, 1
        %v320 = vsel %vm319, %v316, 0.0
        %s321 = scalar_lea.vmem %s1, 16
        %v322 = vld [vmem:[%s321] sm:$0xff]
        %v323 = vpack.c.bf16 %v322, %v322
        %v324 = vpack.c.bf16 %v320, %v320
        %v326 = vsel %vm221, %v323, 0
        %v329 = vsel %vm225, %v324, 0
        %331 = vmatprep.subr.bf16.mxu0 0
        %332 = vmatpush1.bf16.msra.mxu0 %v329
        %333 = vmatprep.subr.bf16.mxu0 0
        %334 = vmatpush1.bf16.msra.mxu0 0
        %335 = vmatprep.subr.bf16.mxu0 0
        %336 = vmatpush1.bf16.msra.mxu0 0
        %337 = vmatprep.subr.bf16.mxu0 0
        %338 = vmatpush1.bf16.msra.mxu0 0
        %339 = vmatprep.subr.bf16.mxu0 0
        %340 = vmatpush1.bf16.msra.mxu0 0
        %341 = vmatprep.subr.bf16.mxu0 0
        %342 = vmatpush1.bf16.msra.mxu0 0
        %343 = vmatprep.subr.bf16.mxu0 0
        %344 = vmatpush1.bf16.msra.mxu0 0
        %345 = vmatprep.subr.bf16.mxu0 0
        %346 = vmatpush1.bf16.msra.mxu0 0
        %347 = vmatprep.subr.bf16.mxu0 0
        %348 = vmatpush1.bf16.msra.mxu0 0
        %349 = vmatprep.subr.bf16.mxu0 0
        %350 = vmatpush1.bf16.msra.mxu0 0
        %351 = vmatprep.subr.bf16.mxu0 0
        %352 = vmatpush1.bf16.msra.mxu0 0
        %353 = vmatprep.subr.bf16.mxu0 0
        %354 = vmatpush1.bf16.msra.mxu0 0
        %355 = vmatprep.subr.bf16.mxu0 0
        %356 = vmatpush1.bf16.msra.mxu0 0
        %357 = vmatprep.subr.bf16.mxu0 0
        %358 = vmatpush1.bf16.msra.mxu0 0
        %359 = vmatprep.subr.bf16.mxu0 0
        %360 = vmatpush1.bf16.msra.mxu0 0
        %361 = vmatprep.subr.bf16.mxu0 0
        %362 = vmatpush1.bf16.msra.mxu0 0
        %363 = vmatprep.mubr.bf16.mxu0 0
        %364 = vmatmul.mubr.bf16.gmra.mrb[0].mxu0 %v326
        %v365 = vpop.f32.mrb[0].mxu0
        %v366 = vadd.f32 0.0, %v365
        %v367 = vpop.f32.mrb[0].mxu0
        %v368 = vpop.f32.mrb[0].mxu0
        %v369 = vpop.f32.mrb[0].mxu0
        %370 = vdwg.mxu0
        %v371 = vadd.f32 %v310, %v366
        %v372 = vld [vmem:[%s2] sm:$0xff]
        %374 = vset.pattern.permute.xlu0 0
        %375 = vperm.xlu0 %374, %v372
        %v376 = vpop.permute.xlu0 %375
        %v378 = vadd.f32 %v371, %v376
        %v379 = vpack.c.bf16 %v378, %v378
        %380 = vst [vmem:[%s189] sm:$0xf] %v379
        %381 = vadd.xlane.f32.xlu0 %v378
        %v382 = vpop.xlane.xlu0 %381
        %v383 = vmul.f32 %v378, %v378
        %384 = vadd.xlane.f32.xlu0 %v383
        %v385 = vpop.xlane.xlu0 %384
        %vm386 = vcmask 7168
        %v387 = vsel %vm386, %v382, %v385
        %vm388 = vcmask 15360
        %389 = vst.msk [vmem:[%s203] sm:$0xff] %vm388, %v387
        %s390 = sand.u32 %s95, 1
        %s391 = scalar_lea.sflag [#allocation3], %s390
        %s392 = sand.u32 %s95, 1
        %s393 = smul.addr %s392, 4
        %s394 = scalar_lea.vmem [#allocation2], %s393
        %p395 = scmp.lt.s32.totalorder %s19, 1
        %s396 = scalar_select %p395, %s19, 1
        %s397 = smul.addr %s396, 8
        %s398 = scalar_lea.vmem %s4, %s397
        // Predicated region
        $region33: #{tpu_custom_call.1} parent=31 // pred_check
          %p399 = pneg %p105
        $region34: #{tpu_custom_call.1} parent=31 // pred_check_branch
          %401 = sbr.rel (%p399) target = $region36
        $region35: #{tpu_custom_call.1} parent=31 // pred_region
          %s403 = ssub.s32 64, 64
          %404 = vsyncadd %s391, %s403
          %s405 = smul.addr %s19, 64
          %s406 = scalar_lea.hbm %s3, %s405
          %s408 = sshll.u32 %s394, 4
          %s409 = int_to_ptr.vmem [resolvable:$true] %s408
          %411 = dma.vmem_to_hbm [thread:$0]  %s409, 64, %s406, %s391
        $region36: #{tpu_custom_call.1} parent=31 // pred_fallthru
          _
        // Predicated region
        $region37: #{tpu_custom_call.1} parent=31 // pred_check
          %p412 = pneg %p131
        $region38: #{tpu_custom_call.1} parent=31 // pred_check_branch
          %414 = sbr.rel (%p412) target = $region40
        $region39: #{tpu_custom_call.1} parent=31 // pred_region
          _
        $region40: #{tpu_custom_call.1} parent=31 // pred_fallthru
          _
      $region32: #{tpu_custom_call.1} parent=5 // pred_fallthru
        _
      %p415 = scmp.le.s32.totalorder 2, %s14
      // Predicated region
      $region41: #{tpu_custom_call.1} parent=5 // pred_check
        %p416 = pneg %p415
      $region42: #{tpu_custom_call.1} parent=5 // pred_check_branch
        %418 = sbr.rel (%p416) target = $region44
      $region43: #{tpu_custom_call.1} parent=5 // pred_region
        %s419 = ssub.s32 %s14, 2
        // Predicated region
        $region45: #{tpu_custom_call.1} parent=43 // pred_check
          %p420 = pneg %p111
        $region46: #{tpu_custom_call.1} parent=43 // pred_check_branch
          %422 = sbr.rel (%p420) target = $region48
        $region47: #{tpu_custom_call.1} parent=43 // pred_region
          %s423 = sand.u32 %s96, 1
          %s424 = scalar_lea.sflag [#allocation3], %s423
          %s425 = sand.u32 %s96, 1
          %s426 = smul.addr %s425, 4
          %s427 = scalar_lea.vmem [#allocation2], %s426
          %428 = dma.done %s424, 64
        $region48: #{tpu_custom_call.1} parent=43 // pred_fallthru
          _
        // Predicated region
        $region49: #{tpu_custom_call.1} parent=43 // pred_check
          %p429 = pneg %p137
        $region50: #{tpu_custom_call.1} parent=43 // pred_check_branch
          %431 = sbr.rel (%p429) target = $region52
        $region51: #{tpu_custom_call.1} parent=43 // pred_region
          %p432 = scmp.lt.s32.totalorder %s20, 1
          %s433 = scalar_select %p432, %s20, 1
          %s434 = smul.addr %s433, 8
          %s435 = scalar_lea.vmem %s4, %s434
        $region52: #{tpu_custom_call.1} parent=43 // pred_fallthru
          _
      $region44: #{tpu_custom_call.1} parent=5 // pred_fallthru
        _
    $region6: #{tpu_custom_call.1} parent=1 // loop_footer
      %s18 = sadd.s32 1, %s14
    $region7: #{tpu_custom_call.1} parent=1 // loop_footer_branch
      %13 = sbr.rel target = $region3
    $region8: #{tpu_custom_call.1} parent=1 // loop_exit
      _
    %436 = vsyncpa [#allocation3], 1
    %s437 = scalar_lea.sflag [#allocation3], 1
    %438 = vsyncpa %s437, 1

</llo_original>
